<compile_context>
chip_gen: v7x
topology: tpu7x:2x2x1
jax: 0.10.0
libtpu: 0.0.40
codegen_flags: <defaults>
</compile_context>

<pallas_src>
import functools

import jax
import jax.numpy as jnp
from jax import lax
from jax.experimental import pallas as pl
from jax.experimental.pallas import tpu as pltpu


def _round_up(n, m):
    return ((n + m - 1) // m) * m


def _largest_divisor_tile(padded, base, cap):
    """Largest multiple of `base` that divides `padded` and is <= cap."""
    if padded <= cap:
        return padded
    for mult in range(cap // base, 0, -1):
        t = mult * base
        if padded % t == 0:
            return t
    return base


def _choose_tn(outp):
    """N tile: split into >=2 lane-aligned tiles when possible (v7x 2-TC sharding)."""
    if outp < 256:
        return outp
    for t in (256, 128):
        if outp % t == 0 and outp // t >= 2:
            return t
    return 128


# Contract x's last dim with w's last dim: (tm, tk) x (tn, tk) -> (tm, tn).
# Avoids any in-kernel transpose / XLU relayout of the (out, in) weight tile.
_DOT_DIMS = (((1,), (1,)), ((), ()))


def _train_kernel(single_k, compute_dtype,
                  x_ref, wmu_ref, wsig_ref, ein_ref, eout_ref, b_ref,
                  o_ref, *scratch):
    xb = x_ref[...]
    xn = xb * ein_ref[...]                       # (tm,tk) * (1,tk) broadcast, O(B*in) VPU work
    if xb.dtype != compute_dtype:
        xb = xb.astype(compute_dtype)
        xn = xn.astype(compute_dtype)
    mu_part = lax.dot_general(xb, wmu_ref[...], _DOT_DIMS,
                              preferred_element_type=jnp.float32)
    sig_part = lax.dot_general(xn, wsig_ref[...], _DOT_DIMS,
                               preferred_element_type=jnp.float32)

    if single_k:
        # Whole reduction fits one tile: no accumulator scratch, no pl.when.
        o_ref[...] = (mu_part + sig_part * eout_ref[...]
                      + b_ref[...]).astype(o_ref.dtype)
    else:
        acc_mu, acc_sig = scratch
        k = pl.program_id(2)

        @pl.when(k == 0)
        def _():
            acc_mu[...] = jnp.zeros_like(acc_mu)
            acc_sig[...] = jnp.zeros_like(acc_sig)

        acc_mu[...] += mu_part
        acc_sig[...] += sig_part

        @pl.when(k == pl.num_programs(2) - 1)
        def _():
            o_ref[...] = (acc_mu[...] + acc_sig[...] * eout_ref[...]
                          + b_ref[...]).astype(o_ref.dtype)


def _eval_kernel(single_k, compute_dtype, x_ref, wmu_ref, b_ref, o_ref, *scratch):
    xb = x_ref[...]
    if xb.dtype != compute_dtype:
        xb = xb.astype(compute_dtype)
    part = lax.dot_general(xb, wmu_ref[...], _DOT_DIMS,
                           preferred_element_type=jnp.float32)
    if single_k:
        o_ref[...] = (part + b_ref[...]).astype(o_ref.dtype)
    else:
        (acc,) = scratch
        k = pl.program_id(2)

        @pl.when(k == 0)
        def _():
            acc[...] = jnp.zeros_like(acc)

        acc[...] += part

        @pl.when(k == pl.num_programs(2) - 1)
        def _():
            o_ref[...] = (acc[...] + b_ref[...]).astype(o_ref.dtype)


def prepare_noisy_linear_params(params, use_bf16=False):
    """Pad / cast the parameters ONCE (per reset_noise or optimizer step).

    Keeps padded, lane-aligned master copies so the per-call forward only has
    to pad x and combine the O(out) bias vector.  With use_bf16=True the weight
    matrices are streamed from HBM as bf16 (f32 accumulation in the kernel).
    """
    wmu = params["weight_mu"]
    out_f, in_f = wmu.shape
    inp = _round_up(in_f, 128)
    outp = _round_up(out_f, 128)
    wdt = jnp.bfloat16 if use_bf16 else jnp.float32
    f32 = jnp.float32

    def pad_w(a):
        return jnp.pad(a.astype(wdt), ((0, outp - out_f), (0, inp - in_f)))

    def pad_out_row(a):
        return jnp.pad(a.astype(f32).reshape(1, out_f), ((0, 0), (0, outp - out_f)))

    def pad_in_row(a):
        return jnp.pad(a.astype(f32).reshape(1, in_f), ((0, 0), (0, inp - in_f)))

    return dict(
        in_features=in_f, out_features=out_f, inp=inp, outp=outp,
        weight_dtype=wdt,
        weight_mu=pad_w(params["weight_mu"]),
        weight_sigma=pad_w(params["weight_sigma"]),
        eps_in=pad_in_row(params["eps_in"]),      # rank-1 factors of weight_epsilon
        eps_out=pad_out_row(params["eps_out"]),
        bias_mu=pad_out_row(params["bias_mu"]),
        bias_sigma=pad_out_row(params["bias_sigma"]),
        bias_epsilon=pad_out_row(params["bias_epsilon"]),
    )


def noisy_linear_forward(x, prepared, training=True):
    """Pallas NoisyLinear forward. x: (B, in_features) -> (B, out_features) f32."""
    in_f = prepared["in_features"]
    out_f = prepared["out_features"]
    inp = prepared["inp"]
    outp = prepared["outp"]
    wdt = prepared["weight_dtype"]
    w_item = jnp.dtype(wdt).itemsize

    B = x.shape[0]
    Bp = _round_up(max(B, 1), 8)

    # Tiles divide the padded dims exactly (no extra padding waste).
    tm = Bp if Bp <= 256 else _largest_divisor_tile(Bp, 8, 256)
    tk = inp if inp <= 2048 else _largest_divisor_tile(inp, 128, 512)
    tn = _choose_tn(outp)
    grid = (Bp // tm, outp // tn, inp // tk)
    single_k = grid[2] == 1

    f32 = jnp.float32
    xp = jnp.pad(x.astype(f32), ((0, Bp - B), (0, inp - in_f)))

    # Bias is O(out): combine per call in the wrapper, ship one lane-dense row.
    if training:
        bias = prepared["bias_mu"] + prepared["bias_sigma"] * prepared["bias_epsilon"]
    else:
        bias = prepared["bias_mu"]

    x_spec = pl.BlockSpec((tm, tk), lambda i, j, k: (i, k))
    w_spec = pl.BlockSpec((tn, tk), lambda i, j, k: (j, k))
    ein_spec = pl.BlockSpec((1, tk), lambda i, j, k: (0, k))
    eout_spec = pl.BlockSpec((1, tn), lambda i, j, k: (0, j))
    b_spec = pl.BlockSpec((1, tn), lambda i, j, k: (0, j))
    out_spec = pl.BlockSpec((tm, tn), lambda i, j, k: (i, j))

    n_w = 2 if training else 1
    cost = pl.CostEstimate(
        flops=2 * Bp * inp * outp * n_w,
        transcendentals=0,
        bytes_accessed=(4 * Bp * inp                       # x
                        + w_item * n_w * outp * inp        # weight_mu (+ weight_sigma)
                        + 4 * (inp + 2 * outp)             # eps_in, eps_out, bias
                        + 4 * Bp * outp))                  # output
    cparams = pltpu.CompilerParams(
        dimension_semantics=("parallel", "parallel", "arbitrary"))

    if training:
        yp = pl.pallas_call(
            functools.partial(_train_kernel, single_k, wdt),
            out_shape=jax.ShapeDtypeStruct((Bp, outp), f32),
            grid_spec=pltpu.PrefetchScalarGridSpec(
                num_scalar_prefetch=0,
                grid=grid,
                in_specs=[x_spec, w_spec, w_spec, ein_spec, eout_spec, b_spec],
                out_specs=out_spec,
                scratch_shapes=([] if single_k
                                else [pltpu.VMEM((tm, tn), jnp.float32)] * 2)),
            compiler_params=cparams,
            cost_estimate=cost,
        )(xp, prepared["weight_mu"], prepared["weight_sigma"],
          prepared["eps_in"], prepared["eps_out"], bias)
    else:
        # Eval path: only x, weight_mu, bias are DMA'd (no sigma/eps traffic).
        yp = pl.pallas_call(
            functools.partial(_eval_kernel, single_k, wdt),
            out_shape=jax.ShapeDtypeStruct((Bp, outp), f32),
            grid_spec=pltpu.PrefetchScalarGridSpec(
                num_scalar_prefetch=0,
                grid=grid,
                in_specs=[x_spec, w_spec, b_spec],
                out_specs=out_spec,
                scratch_shapes=([] if single_k
                                else [pltpu.VMEM((tm, tn), jnp.float32)])),
            compiler_params=cparams,
            cost_estimate=cost,
        )(xp, prepared["weight_mu"], bias)

    return yp[:B, :out_f]


def init_noisy_linear_params(key, in_features, out_features, std_init=0.5):
    """Mirrors NoisyLinear.reset_parameters / reset_noise (host-side, like torch)."""
    k_wmu, k_bmu, k_ein, k_eout = jax.random.split(key, 4)
    mu_range = 1.0 / jnp.sqrt(jnp.float32(in_features))

    weight_mu = jax.random.uniform(
        k_wmu, (out_features, in_features), jnp.float32, -mu_range, mu_range)
    weight_sigma = jnp.full((out_features, in_features),
                            std_init / jnp.sqrt(jnp.float32(in_features)), jnp.float32)
    bias_mu = jax.random.uniform(
        k_bmu, (out_features,), jnp.float32, -mu_range, mu_range)
    bias_sigma = jnp.full((out_features,),
                          std_init / jnp.sqrt(jnp.float32(out_features)), jnp.float32)

    def scale_noise(k, size):
        v = jax.random.normal(k, (size,), jnp.float32)
        return jnp.sign(v) * jnp.sqrt(jnp.abs(v))

    eps_in = scale_noise(k_ein, in_features)
    eps_out = scale_noise(k_eout, out_features)
    weight_epsilon = jnp.outer(eps_out, eps_in)   # epsilon_out.ger(epsilon_in)
    bias_epsilon = eps_out

    return dict(weight_mu=weight_mu, weight_sigma=weight_sigma,
                weight_epsilon=weight_epsilon, bias_mu=bias_mu,
                bias_sigma=bias_sigma, bias_epsilon=bias_epsilon,
                eps_in=eps_in, eps_out=eps_out)


def _reference(x, p, training=True):
    if training:
        w = p["weight_mu"] + p["weight_sigma"] * p["weight_epsilon"]
        b = p["bias_mu"] + p["bias_sigma"] * p["bias_epsilon"]
    else:
        w = p["weight_mu"]
        b = p["bias_mu"]
    return x @ w.T + b


if __name__ == "__main__":
    key = jax.random.PRNGKey(0)
    k_p1, k_x1, k_p2, k_x2, k_p3, k_x3 = jax.random.split(key, 6)

    # Case 1: small DQN-head-sized layer -> single-step grid path.
    batch, in_features, out_features = 2, 32, 64
    params = init_noisy_linear_params(k_p1, in_features, out_features)
    prep = prepare_noisy_linear_params(params)
    x = jax.random.normal(k_x1, (batch, in_features), jnp.float32)

    y_train = jax.block_until_ready(noisy_linear_forward(x, prep, training=True))
    y_eval = jax.block_until_ready(noisy_linear_forward(x, prep, training=False))
    assert y_train.shape == (batch, out_features)
    assert jnp.allclose(y_train, _reference(x, params, training=True), atol=1e-4, rtol=1e-4)
    assert jnp.allclose(y_eval, _reference(x, params, training=False), atol=1e-4, rtol=1e-4)

    # Case 2: non-power-of-two dims (640 -> 300): minimal padding, N grid split.
    b2, in2, out2 = 20, 640, 300
    params2 = init_noisy_linear_params(k_p2, in2, out2)
    prep2 = prepare_noisy_linear_params(params2)
    x2 = jax.random.normal(k_x2, (b2, in2), jnp.float32)
    y2 = jax.block_until_ready(noisy_linear_forward(x2, prep2, training=True))
    assert y2.shape == (b2, out2)
    assert jnp.allclose(y2, _reference(x2, params2, training=True), atol=1e-3, rtol=1e-3)

    # bf16 weight streaming on the same layer (looser tolerance: bf16 mantissa).
    prep2_bf16 = prepare_noisy_linear_params(params2, use_bf16=True)
    y2b = jax.block_until_ready(noisy_linear_forward(x2, prep2_bf16, training=True))
    assert jnp.allclose(y2b, _reference(x2, params2, training=True), atol=5e-2, rtol=5e-2)

    # Case 3: reduction dim > tile cap -> multi-K accumulator path.
    b3, in3, out3 = 16, 2560, 384
    params3 = init_noisy_linear_params(k_p3, in3, out3)
    prep3 = prepare_noisy_linear_params(params3)
    x3 = jax.random.normal(k_x3, (b3, in3), jnp.float32)
    y3 = jax.block_until_ready(noisy_linear_forward(x3, prep3, training=True))
    y3e = jax.block_until_ready(noisy_linear_forward(x3, prep3, training=False))
    assert y3.shape == (b3, out3)
    assert jnp.allclose(y3, _reference(x3, params3, training=True), atol=1e-3, rtol=1e-3)
    assert jnp.allclose(y3e, _reference(x3, params3, training=False), atol=1e-3, rtol=1e-3)

    print("KERNEL_OK")
</pallas_src>

<mosaic_0001>
module attributes {stable_mosaic.version = 11 : i64} {
  func.func @_train_kernel(%arg0: i32, %arg1: i32, %arg2: i32, %arg3: memref<8x128xf32, #tpu.memory_space<vmem>>, %arg4: memref<128x128xf32, #tpu.memory_space<vmem>>, %arg5: memref<128x128xf32, #tpu.memory_space<vmem>>, %arg6: memref<1x128xf32, #tpu.memory_space<vmem>>, %arg7: memref<1x128xf32, #tpu.memory_space<vmem>>, %arg8: memref<1x128xf32, #tpu.memory_space<vmem>>, %arg9: memref<8x128xf32, #tpu.memory_space<vmem>>) attributes {dimension_semantics = [#tpu.dimension_semantics<parallel>, #tpu.dimension_semantics<parallel>, #tpu.dimension_semantics<arbitrary>], iteration_bounds = array<i64: 1, 1, 1>, scalar_prefetch = 0 : i64, scratch_operands = 0 : i64, tpu.core_type = #tpu.core_type<tc>, window_params = [{transform_indices = @transform_0, window_bounds = array<i64: 8, 128>}, {transform_indices = @transform_1, window_bounds = array<i64: 128, 128>}, {transform_indices = @transform_2, window_bounds = array<i64: 128, 128>}, {transform_indices = @transform_3, window_bounds = array<i64: 1, 128>}, {transform_indices = @transform_4, window_bounds = array<i64: 1, 128>}, {transform_indices = @transform_5, window_bounds = array<i64: 1, 128>}, {transform_indices = @transform_6, window_bounds = array<i64: 8, 128>}]} {
    %c0 = arith.constant 0 : index
    %c0_0 = arith.constant 0 : index
    %0 = vector.load %arg3[%c0, %c0_0] : memref<8x128xf32, #tpu.memory_space<vmem>>, vector<8x128xf32>
    %c0_1 = arith.constant 0 : index
    %c0_2 = arith.constant 0 : index
    %1 = vector.load %arg6[%c0_1, %c0_2] : memref<1x128xf32, #tpu.memory_space<vmem>>, vector<1x128xf32>
    %2 = vector.broadcast %1 : vector<1x128xf32> to vector<8x128xf32>
    %3 = arith.mulf %0, %2 : vector<8x128xf32>
    %c0_3 = arith.constant 0 : index
    %c0_4 = arith.constant 0 : index
    %4 = vector.load %arg4[%c0_3, %c0_4] : memref<128x128xf32, #tpu.memory_space<vmem>>, vector<128x128xf32>
    %cst = arith.constant dense<0.000000e+00> : vector<8x128xf32>
    %5 = tpu.matmul %0, %4, %cst {dimension_numbers = #tpu.dot_dimension_numbers<[1], [1], [0], [0], [0, 0, 1, 0], [], []>} : vector<8x128xf32>, vector<128x128xf32>, vector<8x128xf32> -> vector<8x128xf32>
    %c0_5 = arith.constant 0 : index
    %c0_6 = arith.constant 0 : index
    %6 = vector.load %arg5[%c0_5, %c0_6] : memref<128x128xf32, #tpu.memory_space<vmem>>, vector<128x128xf32>
    %cst_7 = arith.constant dense<0.000000e+00> : vector<8x128xf32>
    %7 = tpu.matmul %3, %6, %cst_7 {dimension_numbers = #tpu.dot_dimension_numbers<[1], [1], [0], [0], [0, 0, 1, 0], [], []>} : vector<8x128xf32>, vector<128x128xf32>, vector<8x128xf32> -> vector<8x128xf32>
    %c0_8 = arith.constant 0 : index
    %c0_9 = arith.constant 0 : index
    %8 = vector.load %arg7[%c0_8, %c0_9] : memref<1x128xf32, #tpu.memory_space<vmem>>, vector<1x128xf32>
    %9 = vector.broadcast %8 : vector<1x128xf32> to vector<8x128xf32>
    %10 = arith.mulf %7, %9 : vector<8x128xf32>
    %11 = arith.addf %5, %10 : vector<8x128xf32>
    %c0_10 = arith.constant 0 : index
    %c0_11 = arith.constant 0 : index
    %12 = vector.load %arg8[%c0_10, %c0_11] : memref<1x128xf32, #tpu.memory_space<vmem>>, vector<1x128xf32>
    %13 = vector.broadcast %12 : vector<1x128xf32> to vector<8x128xf32>
    %14 = arith.addf %11, %13 : vector<8x128xf32>
    %c0_12 = arith.constant 0 : index
    %c0_13 = arith.constant 0 : index
    %15 = vector.load %arg9[%c0_12, %c0_13] : memref<8x128xf32, #tpu.memory_space<vmem>>, vector<8x128xf32>
    tpu.vector_store %arg9[%c0_12, %c0_13], %14 {strides = array<i32>} : memref<8x128xf32, #tpu.memory_space<vmem>>, vector<8x128xf32>,
    return
  }
  func.func @transform_0(%arg0: i32, %arg1: i32, %arg2: i32) -> (i32, i32) {
    %c0_i32 = arith.constant 0 : i32
    return %arg0, %arg2 : i32, i32
  }
  func.func @transform_1(%arg0: i32, %arg1: i32, %arg2: i32) -> (i32, i32) {
    %c0_i32 = arith.constant 0 : i32
    return %arg1, %arg2 : i32, i32
  }
  func.func @transform_2(%arg0: i32, %arg1: i32, %arg2: i32) -> (i32, i32) {
    %c0_i32 = arith.constant 0 : i32
    return %arg1, %arg2 : i32, i32
  }
  func.func @transform_3(%arg0: i32, %arg1: i32, %arg2: i32) -> (i32, i32) {
    %c0_i32 = arith.constant 0 : i32
    %c0_i32_0 = arith.constant 0 : i32
    return %c0_i32, %arg2 : i32, i32
  }
  func.func @transform_4(%arg0: i32, %arg1: i32, %arg2: i32) -> (i32, i32) {
    %c0_i32 = arith.constant 0 : i32
    %c0_i32_0 = arith.constant 0 : i32
    return %c0_i32, %arg1 : i32, i32
  }
  func.func @transform_5(%arg0: i32, %arg1: i32, %arg2: i32) -> (i32, i32) {
    %c0_i32 = arith.constant 0 : i32
    %c0_i32_0 = arith.constant 0 : i32
    return %c0_i32, %arg1 : i32, i32
  }
  func.func @transform_6(%arg0: i32, %arg1: i32, %arg2: i32) -> (i32, i32) {
    %c0_i32 = arith.constant 0 : i32
    return %arg0, %arg1 : i32, i32
  }
}

</mosaic_0001>

<llo_original>
// kernel: tpu_custom_call.1
$region0: #{tpu_custom_call.1}
  #allocation0 [shape = 'u32[]', space=smem, size = 0x4, offset = 0x4, fixed_abs, tag = 'smem constant byte address 0x4 - core index']
  #allocation1 [shape = 'u32[144,128]{1,0:T(1,128)}', space=vmem, size = 0x12000, scoped, tag = 'internal scratch']
  %s0 = inlined_call_operand.hbm [shape: f32[8,128], index: 0, kind: input, shape index: {}]
  %s1 = inlined_call_operand.hbm [shape: f32[128,128], index: 1, kind: input, shape index: {}]
  %s2 = inlined_call_operand.hbm [shape: f32[128,128], index: 2, kind: input, shape index: {}]
  %s3 = inlined_call_operand.vmem [shape: f32[1,128], index: 3, kind: input, shape index: {}]
  %s4 = inlined_call_operand.vmem [shape: f32[1,128], index: 4, kind: input, shape index: {}]
  %s5 = inlined_call_operand.vmem [shape: f32[1,128], index: 5, kind: input, shape index: {}]
  %s6 = inlined_call_operand.hbm [shape: f32[8,128], index: 6, kind: output, shape index: {}]
  %s7 = sld [smem:[#allocation0]]
  $region46: #{tpu_custom_call.1} parent=0
    _
  %s9 = ssub.s32 1, %s7
  %s10 = scalar_select 0, %s9, %s7
  $region1: #{tpu_custom_call.1} parent=0
    #allocation2 [shape = 'u8[4096]{0}', space=vmem, size = 0x1000, scoped, tag = 'input window, operand 0, single buffered']
    #allocation3 [shape = 's32[1]{0}', space=sflag, size = 0x4, scoped, tag = 'scoped memory for tpu_custom_call.1']
    #allocation4 [shape = 's32[1]{0}', space=sflag, size = 0x4, scoped, tag = 'scoped memory for tpu_custom_call.1']
    #allocation5 [shape = 'u8[65536]{0}', space=vmem, size = 0x10000, scoped, tag = 'input window, operand 1, single buffered']
    #allocation6 [shape = 's32[1]{0}', space=sflag, size = 0x4, scoped, tag = 'scoped memory for tpu_custom_call.1']
    #allocation7 [shape = 'u8[65536]{0}', space=vmem, size = 0x10000, scoped, tag = 'input window, operand 2, single buffered']
    #allocation8 [shape = 'u8[4096]{0}', space=vmem, size = 0x1000, scoped, tag = 'output window, operand 0, single buffered']
    %11 = vsyncpa [#allocation3], 0
    %12 = vsyncpa [#allocation6], 0
    %13 = vsyncpa [#allocation4], 0
    // Predicated region
    $region2: #{tpu_custom_call.1} parent=1 // pred_check
      _
    $region3: #{tpu_custom_call.1} parent=1 // pred_check_branch
      %15 = sbr.rel (0) target = $region5
    $region4: #{tpu_custom_call.1} parent=1 // pred_region
      %s17 = ssub.s32 128, 128
      %18 = vsyncadd [#allocation3], %s17
      %s20 = sshll.u32 [#allocation2], 4
      %s21 = int_to_ptr.vmem [resolvable:$true] %s20
      %23 = dma.hbm_to_vmem [thread:$0]  %s0, 128, %s21, [#allocation3]
    $region5: #{tpu_custom_call.1} parent=1 // pred_fallthru
      _
    // Predicated region
    $region6: #{tpu_custom_call.1} parent=1 // pred_check
      _
    $region7: #{tpu_custom_call.1} parent=1 // pred_check_branch
      %25 = sbr.rel (0) target = $region9
    $region8: #{tpu_custom_call.1} parent=1 // pred_region
      %s27 = ssub.s32 2048, 2048
      %28 = vsyncadd [#allocation6], %s27
      %s29 = sshll.u32 [#allocation5], 4
      %s30 = int_to_ptr.vmem [resolvable:$true] %s29
      %35 = dma.hbm_to_vmem [thread:$0]  %s1, 2048, %s30, [#allocation6], 128, 128, 8
    $region9: #{tpu_custom_call.1} parent=1 // pred_fallthru
      _
    // Predicated region
    $region10: #{tpu_custom_call.1} parent=1 // pred_check
      _
    $region11: #{tpu_custom_call.1} parent=1 // pred_check_branch
      %37 = sbr.rel (0) target = $region13
    $region12: #{tpu_custom_call.1} parent=1 // pred_region
      %s39 = ssub.s32 2048, 2048
      %40 = vsyncadd [#allocation6], %s39
      %s41 = sshll.u32 [#allocation7], 4
      %s42 = int_to_ptr.vmem [resolvable:$true] %s41
      %47 = dma.hbm_to_vmem [thread:$0]  %s2, 2048, %s42, [#allocation6], 128, 128, 8
    $region13: #{tpu_custom_call.1} parent=1 // pred_fallthru
      _
    // Predicated region
    $region14: #{tpu_custom_call.1} parent=1 // pred_check
      _
    $region15: #{tpu_custom_call.1} parent=1 // pred_check_branch
      %49 = sbr.rel (0) target = $region17
    $region16: #{tpu_custom_call.1} parent=1 // pred_region
      _
    $region17: #{tpu_custom_call.1} parent=1 // pred_fallthru
      _
    // Predicated region
    $region18: #{tpu_custom_call.1} parent=1 // pred_check
      _
    $region19: #{tpu_custom_call.1} parent=1 // pred_check_branch
      %51 = sbr.rel (0) target = $region21
    $region20: #{tpu_custom_call.1} parent=1 // pred_region
      _
    $region21: #{tpu_custom_call.1} parent=1 // pred_fallthru
      _
    // Predicated region
    $region22: #{tpu_custom_call.1} parent=1 // pred_check
      _
    $region23: #{tpu_custom_call.1} parent=1 // pred_check_branch
      %53 = sbr.rel (0) target = $region25
    $region24: #{tpu_custom_call.1} parent=1 // pred_region
      _
    $region25: #{tpu_custom_call.1} parent=1 // pred_fallthru
      _
    // Predicated region
    $region26: #{tpu_custom_call.1} parent=1 // pred_check
      _
    $region27: #{tpu_custom_call.1} parent=1 // pred_check_branch
      %55 = sbr.rel (0) target = $region29
    $region28: #{tpu_custom_call.1} parent=1 // pred_region
      %56 = dma.done [#allocation3], 128
    $region29: #{tpu_custom_call.1} parent=1 // pred_fallthru
      _
    // Predicated region
    $region30: #{tpu_custom_call.1} parent=1 // pred_check
      _
    $region31: #{tpu_custom_call.1} parent=1 // pred_check_branch
      %58 = sbr.rel (0) target = $region33
    $region32: #{tpu_custom_call.1} parent=1 // pred_region
      %59 = dma.done [#allocation6], 2048
    $region33: #{tpu_custom_call.1} parent=1 // pred_fallthru
      _
    // Predicated region
    $region34: #{tpu_custom_call.1} parent=1 // pred_check
      _
    $region35: #{tpu_custom_call.1} parent=1 // pred_check_branch
      %61 = sbr.rel (0) target = $region37
    $region36: #{tpu_custom_call.1} parent=1 // pred_region
      %62 = dma.done [#allocation6], 2048
    $region37: #{tpu_custom_call.1} parent=1 // pred_fallthru
      _
    %v63 = vld [vmem:[#allocation2] sm:$0xff]
    %v64 = vld [vmem:[%s3] sm:$0x1]
    %v66 = vlaneseq
    %v67 = vshrl.u32 %v66, 7
    %v68 = vsub.s32 0, %v67
    %v69 = vrot.slane %v64, %v68
    %v71 = vmul.f32 %v63, %v69
    %v72 = vld [vmem:[#allocation5] sm:$0xff]
    %v73 = vld [vmem:[#allocation5 + $0x8] sm:$0xff]
    %v74 = vld [vmem:[#allocation5 + $0x10] sm:$0xff]
    %v75 = vld [vmem:[#allocation5 + $0x18] sm:$0xff]
    %v76 = vld [vmem:[#allocation5 + $0x20] sm:$0xff]
    %v77 = vld [vmem:[#allocation5 + $0x28] sm:$0xff]
    %v78 = vld [vmem:[#allocation5 + $0x30] sm:$0xff]
    %v79 = vld [vmem:[#allocation5 + $0x38] sm:$0xff]
    %v80 = vld [vmem:[#allocation5 + $0x40] sm:$0xff]
    %v81 = vld [vmem:[#allocation5 + $0x48] sm:$0xff]
    %v82 = vld [vmem:[#allocation5 + $0x50] sm:$0xff]
    %v83 = vld [vmem:[#allocation5 + $0x58] sm:$0xff]
    %v84 = vld [vmem:[#allocation5 + $0x60] sm:$0xff]
    %v85 = vld [vmem:[#allocation5 + $0x68] sm:$0xff]
    %v86 = vld [vmem:[#allocation5 + $0x70] sm:$0xff]
    %v87 = vld [vmem:[#allocation5 + $0x78] sm:$0xff]
    %v88 = vld [vmem:[#allocation7] sm:$0xff]
    %v89 = vld [vmem:[#allocation7 + $0x8] sm:$0xff]
    %v90 = vld [vmem:[#allocation7 + $0x10] sm:$0xff]
    %v91 = vld [vmem:[#allocation7 + $0x18] sm:$0xff]
    %v92 = vld [vmem:[#allocation7 + $0x20] sm:$0xff]
    %v93 = vld [vmem:[#allocation7 + $0x28] sm:$0xff]
    %v94 = vld [vmem:[#allocation7 + $0x30] sm:$0xff]
    %v95 = vld [vmem:[#allocation7 + $0x38] sm:$0xff]
    %v96 = vld [vmem:[#allocation7 + $0x40] sm:$0xff]
    %v97 = vld [vmem:[#allocation7 + $0x48] sm:$0xff]
    %v98 = vld [vmem:[#allocation7 + $0x50] sm:$0xff]
    %v99 = vld [vmem:[#allocation7 + $0x58] sm:$0xff]
    %v100 = vld [vmem:[#allocation7 + $0x60] sm:$0xff]
    %v101 = vld [vmem:[#allocation7 + $0x68] sm:$0xff]
    %v102 = vld [vmem:[#allocation7 + $0x70] sm:$0xff]
    %v103 = vld [vmem:[#allocation7 + $0x78] sm:$0xff]
    %104 = vmatprep.subr.mxu0 0.0
    %105 = vmatpush1.xpose.msra.mxu0 %v88
    %106 = vmatprep.subr.mxu0 0.0
    %107 = vmatpush1.xpose.msra.mxu0 %v89
    %108 = vmatprep.subr.mxu0 0.0
    %109 = vmatpush1.xpose.msra.mxu0 %v90
    %110 = vmatprep.subr.mxu0 0.0
    %111 = vmatpush1.xpose.msra.mxu0 %v91
    %112 = vmatprep.subr.mxu0 0.0
    %113 = vmatpush1.xpose.msra.mxu0 %v92
    %114 = vmatprep.subr.mxu0 0.0
    %115 = vmatpush1.xpose.msra.mxu0 %v93
    %116 = vmatprep.subr.mxu0 0.0
    %117 = vmatpush1.xpose.msra.mxu0 %v94
    %118 = vmatprep.subr.mxu0 0.0
    %119 = vmatpush1.xpose.msra.mxu0 %v95
    %120 = vmatprep.subr.mxu0 0.0
    %121 = vmatpush1.xpose.msra.mxu0 %v96
    %122 = vmatprep.subr.mxu0 0.0
    %123 = vmatpush1.xpose.msra.mxu0 %v97
    %124 = vmatprep.subr.mxu0 0.0
    %125 = vmatpush1.xpose.msra.mxu0 %v98
    %126 = vmatprep.subr.mxu0 0.0
    %127 = vmatpush1.xpose.msra.mxu0 %v99
    %128 = vmatprep.subr.mxu0 0.0
    %129 = vmatpush1.xpose.msra.mxu0 %v100
    %130 = vmatprep.subr.mxu0 0.0
    %131 = vmatpush1.xpose.msra.mxu0 %v101
    %132 = vmatprep.subr.mxu0 0.0
    %133 = vmatpush1.xpose.msra.mxu0 %v102
    %134 = vmatprep.subr.mxu0 0.0
    %135 = vmatpush1.xpose.msra.mxu0 %v103
    %136 = vmatprep.subr.mxu0 0.0
    %137 = vmatpush1.xpose.msra.mxu0 0.0
    %138 = vmatprep.subr.mxu0 0.0
    %139 = vmatpush1.xpose.msra.mxu0 0.0
    %140 = vmatprep.subr.mxu0 0.0
    %141 = vmatpush1.xpose.msra.mxu0 0.0
    %142 = vmatprep.subr.mxu0 0.0
    %143 = vmatpush1.xpose.msra.mxu0 0.0
    %144 = vmatprep.subr.mxu0 0.0
    %145 = vmatpush1.xpose.msra.mxu0 0.0
    %146 = vmatprep.subr.mxu0 0.0
    %147 = vmatpush1.xpose.msra.mxu0 0.0
    %148 = vmatprep.subr.mxu0 0.0
    %149 = vmatpush1.xpose.msra.mxu0 0.0
    %150 = vmatprep.subr.mxu0 0.0
    %151 = vmatpush1.xpose.msra.mxu0 0.0
    %152 = vmatprep.subr.mxu0 0.0
    %153 = vmatpush1.xpose.msra.mxu0 0.0
    %154 = vmatprep.subr.mxu0 0.0
    %155 = vmatpush1.xpose.msra.mxu0 0.0
    %156 = vmatprep.subr.mxu0 0.0
    %157 = vmatpush1.xpose.msra.mxu0 0.0
    %158 = vmatprep.subr.mxu0 0.0
    %159 = vmatpush1.xpose.msra.mxu0 0.0
    %160 = vmatprep.subr.mxu0 0.0
    %161 = vmatpush1.xpose.msra.mxu0 0.0
    %162 = vmatprep.subr.mxu0 0.0
    %163 = vmatpush1.xpose.msra.mxu0 0.0
    %164 = vmatprep.subr.mxu0 0.0
    %165 = vmatpush1.xpose.msra.mxu0 0.0
    %166 = vmatprep.subr.mxu0 0.0
    %167 = vmatpush1.xpose.msra.mxu0 0.0
    %168 = vmatprep.mubr.f32.mxu0 0.0
    %169 = vmatmul.mubr.f32.gmra.mrb[0].mxu0 %v71
    %v170 = vpop.f32.mrb[0].mxu0
    %v171 = vadd.f32 0.0, %v170
    %v172 = vpop.f32.mrb[0].mxu0
    %173 = vdwg.mxu0
    %v174 = vld [vmem:[%s4] sm:$0x1]
    %v176 = vlaneseq
    %v177 = vshrl.u32 %v176, 7
    %v178 = vsub.s32 0, %v177
    %v179 = vrot.slane %v174, %v178
    %v181 = vmul.f32 %v171, %v179
    %182 = vmatprep.subr.mxu0 0.0
    %183 = vmatpush1.xpose.msra.mxu0 %v72
    %184 = vmatprep.subr.mxu0 0.0
    %185 = vmatpush1.xpose.msra.mxu0 %v73
    %186 = vmatprep.subr.mxu0 0.0
    %187 = vmatpush1.xpose.msra.mxu0 %v74
    %188 = vmatprep.subr.mxu0 0.0
    %189 = vmatpush1.xpose.msra.mxu0 %v75
    %190 = vmatprep.subr.mxu0 0.0
    %191 = vmatpush1.xpose.msra.mxu0 %v76
    %192 = vmatprep.subr.mxu0 0.0
    %193 = vmatpush1.xpose.msra.mxu0 %v77
    %194 = vmatprep.subr.mxu0 0.0
    %195 = vmatpush1.xpose.msra.mxu0 %v78
    %196 = vmatprep.subr.mxu0 0.0
    %197 = vmatpush1.xpose.msra.mxu0 %v79
    %198 = vmatprep.subr.mxu0 0.0
    %199 = vmatpush1.xpose.msra.mxu0 %v80
    %200 = vmatprep.subr.mxu0 0.0
    %201 = vmatpush1.xpose.msra.mxu0 %v81
    %202 = vmatprep.subr.mxu0 0.0
    %203 = vmatpush1.xpose.msra.mxu0 %v82
    %204 = vmatprep.subr.mxu0 0.0
    %205 = vmatpush1.xpose.msra.mxu0 %v83
    %206 = vmatprep.subr.mxu0 0.0
    %207 = vmatpush1.xpose.msra.mxu0 %v84
    %208 = vmatprep.subr.mxu0 0.0
    %209 = vmatpush1.xpose.msra.mxu0 %v85
    %210 = vmatprep.subr.mxu0 0.0
    %211 = vmatpush1.xpose.msra.mxu0 %v86
    %212 = vmatprep.subr.mxu0 0.0
    %213 = vmatpush1.xpose.msra.mxu0 %v87
    %214 = vmatprep.subr.mxu0 0.0
    %215 = vmatpush1.xpose.msra.mxu0 0.0
    %216 = vmatprep.subr.mxu0 0.0
    %217 = vmatpush1.xpose.msra.mxu0 0.0
    %218 = vmatprep.subr.mxu0 0.0
    %219 = vmatpush1.xpose.msra.mxu0 0.0
    %220 = vmatprep.subr.mxu0 0.0
    %221 = vmatpush1.xpose.msra.mxu0 0.0
    %222 = vmatprep.subr.mxu0 0.0
    %223 = vmatpush1.xpose.msra.mxu0 0.0
    %224 = vmatprep.subr.mxu0 0.0
    %225 = vmatpush1.xpose.msra.mxu0 0.0
    %226 = vmatprep.subr.mxu0 0.0
    %227 = vmatpush1.xpose.msra.mxu0 0.0
    %228 = vmatprep.subr.mxu0 0.0
    %229 = vmatpush1.xpose.msra.mxu0 0.0
    %230 = vmatprep.subr.mxu0 0.0
    %231 = vmatpush1.xpose.msra.mxu0 0.0
    %232 = vmatprep.subr.mxu0 0.0
    %233 = vmatpush1.xpose.msra.mxu0 0.0
    %234 = vmatprep.subr.mxu0 0.0
    %235 = vmatpush1.xpose.msra.mxu0 0.0
    %236 = vmatprep.subr.mxu0 0.0
    %237 = vmatpush1.xpose.msra.mxu0 0.0
    %238 = vmatprep.subr.mxu0 0.0
    %239 = vmatpush1.xpose.msra.mxu0 0.0
    %240 = vmatprep.subr.mxu0 0.0
    %241 = vmatpush1.xpose.msra.mxu0 0.0
    %242 = vmatprep.subr.mxu0 0.0
    %243 = vmatpush1.xpose.msra.mxu0 0.0
    %244 = vmatprep.subr.mxu0 0.0
    %245 = vmatpush1.xpose.msra.mxu0 0.0
    %246 = vmatprep.mubr.f32.mxu0 0.0
    %247 = vmatmul.mubr.f32.gmra.mrb[0].mxu0 %v63
    %v248 = vpop.f32.mrb[0].mxu0
    %v249 = vadd.f32 %v181, %v248
    %v250 = vpop.f32.mrb[0].mxu0
    %251 = vdwg.mxu0
    %v252 = vld [vmem:[%s5] sm:$0x1]
    %v254 = vlaneseq
    %v255 = vshrl.u32 %v254, 7
    %v256 = vsub.s32 0, %v255
    %v257 = vrot.slane %v252, %v256
    %v259 = vadd.f32 %v249, %v257
    %260 = vst [vmem:[#allocation8] sm:$0xff] %v259
    // Predicated region
    $region38: #{tpu_custom_call.1} parent=1 // pred_check
      _
    $region39: #{tpu_custom_call.1} parent=1 // pred_check_branch
      %262 = sbr.rel (0) target = $region41
    $region40: #{tpu_custom_call.1} parent=1 // pred_region
      %s264 = ssub.s32 128, 128
      %265 = vsyncadd [#allocation4], %s264
      %s267 = sshll.u32 [#allocation8], 4
      %s268 = int_to_ptr.vmem [resolvable:$true] %s267
      %270 = dma.vmem_to_hbm [thread:$0]  %s268, 128, %s6, [#allocation4]
    $region41: #{tpu_custom_call.1} parent=1 // pred_fallthru
      _
    // Predicated region
    $region42: #{tpu_custom_call.1} parent=1 // pred_check
      _
    $region43: #{tpu_custom_call.1} parent=1 // pred_check_branch
      %272 = sbr.rel (0) target = $region45
    $region44: #{tpu_custom_call.1} parent=1 // pred_region
      %273 = dma.done [#allocation4], 128
    $region45: #{tpu_custom_call.1} parent=1 // pred_fallthru
      _
    %274 = vsyncpa [#allocation3], 1
    %275 = vsyncpa [#allocation6], 1
    %276 = vsyncpa [#allocation4], 1

</llo_original>
